<compile_context>
chip_gen: v5e
topology: v5e:2x2
jax: 0.10.0
libtpu: 0.0.40
codegen_flags: <defaults>
</compile_context>

<pallas_src>
import math
import functools
from typing import NamedTuple

import jax
import jax.numpy as jnp
from jax.experimental import pallas as pl
from jax.experimental.pallas import tpu as pltpu


def _round_up(x, m):
    return ((x + m - 1) // m) * m


def _pick_tile(dim, align, max_tile):
    """Largest tile <= max_tile, multiple of `align`, with minimal padding overshoot."""
    d = _round_up(max(dim, 1), align)
    n_units = d // align
    max_units = max(max_tile // align, 1)
    n_tiles = -(-n_units // max_units)        # ceil
    units_per_tile = -(-n_units // n_tiles)   # ceil
    return units_per_tile * align


def _vmem_budget():
    """(tile budget, vmem_limit_bytes) derived from the chip's physical VMEM."""
    try:
        physical = int(pltpu.get_tpu_info().vmem_capacity_bytes)
        if physical < 16 * 1024 * 1024:
            physical = 64 * 1024 * 1024
    except Exception:
        physical = 64 * 1024 * 1024           # conservative (v7x-sized) fallback
    vmem_limit = min((physical * 3) // 4, 80 * 1024 * 1024)
    budget = vmem_limit - 8 * 1024 * 1024     # headroom for compiler-internal scratch
    return budget, vmem_limit


# ---------------------------------------------------------------------------
# Kernels
# ---------------------------------------------------------------------------
def _fused_kernel(x_ref, w_ref, b_ref, o_ref):
    """Single MXU pass over the full K dim, fused bias + sigmoid epilogue."""
    p = jnp.dot(x_ref[...], w_ref[...], preferred_element_type=jnp.float32)
    p = p + b_ref[...]                                   # bias broadcast over rows
    # sigmoid(p) = 0.5*(1 + tanh(0.5*p)): a single EUP op, exact and overflow-free.
    o_ref[...] = (0.5 * (1.0 + jnp.tanh(0.5 * p))).astype(o_ref.dtype)


def _ksplit_kernel(x_ref, w_ref, b_ref, o_ref, acc_ref):
    """Fallback for very large input_dim: K-tiled reduction, f32 accumulator."""
    k = pl.program_id(2)

    @pl.when(k == 0)
    def _():
        acc_ref[...] = jnp.zeros_like(acc_ref)

    acc_ref[...] += jnp.dot(x_ref[...], w_ref[...], preferred_element_type=jnp.float32)

    @pl.when(k == pl.num_programs(2) - 1)
    def _():
        p = acc_ref[...] + b_ref[...]
        o_ref[...] = (0.5 * (1.0 + jnp.tanh(0.5 * p))).astype(o_ref.dtype)


# ---------------------------------------------------------------------------
# Parameter preparation (done once, outside the per-call path)
# ---------------------------------------------------------------------------
class _Cfg(NamedTuple):
    K: int
    N: int
    Np: int
    tn: int
    use_bf16: bool
    ksplit: bool
    tk: int
    Kp: int
    tm_max: int
    vmem_limit: int


def prepare_kernel_mapping(W, b, *, use_bf16=True, tm_max=512, tn_max=1024):
    """Cast/pad W and b once and freeze all N/K-dependent tiling decisions."""
    K, N = W.shape
    assert b.shape == (N,)
    in_dtype = jnp.bfloat16 if use_bf16 else jnp.float32
    elem = jnp.dtype(in_dtype).itemsize

    budget, vmem_limit = _vmem_budget()
    tn = _pick_tile(N, 128, tn_max)
    Np = _round_up(N, tn)

    # Double-buffered x/W/bias/out tiles + f32 epilogue intermediates.
    def fast_bytes(tm_, tn_, k_):
        return (2 * (tm_ * k_ + k_ * tn_) * elem + 2 * tn_ * 4
                + 2 * tm_ * tn_ * 4 + 2 * tm_ * tn_ * 4)

    def split_bytes(tm_, tn_, tk_):
        return (2 * (tm_ * tk_ + tk_ * tn_) * elem + 2 * tn_ * 4
                + 2 * tm_ * tn_ * 4 + 3 * tm_ * tn_ * 4)   # + acc scratch

    ksplit = fast_bytes(tm_max, tn, K) > budget
    if ksplit:
        tk = 4096 if use_bf16 else 2048
        while split_bytes(tm_max, tn, tk) > budget and tk > 256:
            tk //= 2
        tk = max(tk, 256)
        Kp = _round_up(K, tk)
    else:
        tk = K
        Kp = K

    Wp = W.astype(in_dtype)
    bp = b.reshape(1, N).astype(jnp.float32)
    if Np != N:
        Wp = jnp.pad(Wp, ((0, 0), (0, Np - N)))
        bp = jnp.pad(bp, ((0, 0), (0, Np - N)))
    if Kp != K:
        Wp = jnp.pad(Wp, ((0, Kp - K), (0, 0)))

    cfg = _Cfg(K=K, N=N, Np=Np, tn=tn, use_bf16=use_bf16, ksplit=ksplit,
               tk=tk, Kp=Kp, tm_max=tm_max, vmem_limit=int(vmem_limit))
    return cfg, Wp, bp


# ---------------------------------------------------------------------------
# Per-call apply (only x is cast/padded here)
# ---------------------------------------------------------------------------
@functools.partial(jax.jit, static_argnames=("cfg",))
def kernel_mapping_sigmoid_apply(x, Wp, bp, *, cfg):
    orig_shape = x.shape
    K, N = cfg.K, cfg.N
    assert orig_shape[-1] == K
    x2d = x.reshape(-1, K)
    M = x2d.shape[0]
    out_dtype = x.dtype
    in_dtype = jnp.bfloat16 if cfg.use_bf16 else jnp.float32
    elem = jnp.dtype(in_dtype).itemsize
    out_elem = jnp.dtype(out_dtype).itemsize

    m_align = 16 if cfg.use_bf16 else 8
    tm = _pick_tile(M, m_align, cfg.tm_max)
    Mp = _round_up(M, tm)
    grid_m = Mp // tm
    grid_n = cfg.Np // cfg.tn
    # Single-tile grid: split rows into two blocks so both v7x TCs get work.
    if grid_m == 1 and grid_n == 1 and tm >= 2 * m_align:
        tm = _round_up(tm // 2, m_align)
        Mp = _round_up(M, tm)
        grid_m = Mp // tm

    xp = x2d.astype(in_dtype)
    if cfg.Kp != K:
        xp = jnp.pad(xp, ((0, 0), (0, cfg.Kp - K)))
    if Mp != M:
        xp = jnp.pad(xp, ((0, Mp - M), (0, 0)))

    cost = pl.CostEstimate(
        flops=2 * Mp * cfg.Kp * cfg.Np,
        transcendentals=Mp * cfg.Np,
        bytes_accessed=(Mp * cfg.Kp * elem + cfg.Kp * cfg.Np * elem
                        + cfg.Np * 4 + Mp * cfg.Np * out_elem),
    )

    if not cfg.ksplit:
        K_ = cfg.Kp
        # Hold resident the operand whose re-streamed HBM traffic would be larger.
        traffic_if_w_streamed = grid_m * K_ * cfg.Np   # i outer, j inner (x resident)
        traffic_if_x_streamed = grid_n * Mp * K_       # j outer, i inner (W resident)
        if traffic_if_x_streamed <= traffic_if_w_streamed:
            grid = (grid_n, grid_m)                    # i innermost -> W tile resident
            in_specs = [
                pl.BlockSpec((tm, K_), lambda j, i: (i, 0)),
                pl.BlockSpec((K_, cfg.tn), lambda j, i: (0, j)),
                pl.BlockSpec((1, cfg.tn), lambda j, i: (0, j)),
            ]
            out_spec = pl.BlockSpec((tm, cfg.tn), lambda j, i: (i, j))
        else:
            grid = (grid_m, grid_n)                    # j innermost -> x tile resident
            in_specs = [
                pl.BlockSpec((tm, K_), lambda i, j: (i, 0)),
                pl.BlockSpec((K_, cfg.tn), lambda i, j: (0, j)),
                pl.BlockSpec((1, cfg.tn), lambda i, j: (0, j)),
            ]
            out_spec = pl.BlockSpec((tm, cfg.tn), lambda i, j: (i, j))

        out = pl.pallas_call(
            _fused_kernel,
            out_shape=jax.ShapeDtypeStruct((Mp, cfg.Np), out_dtype),
            grid_spec=pltpu.PrefetchScalarGridSpec(
                num_scalar_prefetch=0,
                grid=grid,
                in_specs=in_specs,
                out_specs=out_spec,
            ),
            compiler_params=pltpu.CompilerParams(
                dimension_semantics=("parallel", "parallel"),
                vmem_limit_bytes=cfg.vmem_limit),
            cost_estimate=cost,
        )(xp, Wp, bp)
    else:
        grid = (grid_m, grid_n, cfg.Kp // cfg.tk)
        out = pl.pallas_call(
            _ksplit_kernel,
            out_shape=jax.ShapeDtypeStruct((Mp, cfg.Np), out_dtype),
            grid_spec=pltpu.PrefetchScalarGridSpec(
                num_scalar_prefetch=0,
                grid=grid,
                in_specs=[
                    pl.BlockSpec((tm, cfg.tk), lambda i, j, k: (i, k)),
                    pl.BlockSpec((cfg.tk, cfg.tn), lambda i, j, k: (k, j)),
                    pl.BlockSpec((1, cfg.tn), lambda i, j, k: (0, j)),
                ],
                out_specs=pl.BlockSpec((tm, cfg.tn), lambda i, j, k: (i, j)),
                scratch_shapes=[pltpu.VMEM((tm, cfg.tn), jnp.float32)],
            ),
            compiler_params=pltpu.CompilerParams(
                dimension_semantics=("parallel", "parallel", "arbitrary"),
                vmem_limit_bytes=cfg.vmem_limit),
            cost_estimate=cost,
        )(xp, Wp, bp)

    if Mp != M or cfg.Np != N:
        out = out[:M, :N]
    return out.reshape(orig_shape[:-1] + (N,))


def kernel_mapping_sigmoid(x, W, b, *, use_bf16=True):
    """One-shot convenience wrapper (prepares params every call; prefer
    prepare_kernel_mapping + kernel_mapping_sigmoid_apply for repeated use)."""
    cfg, Wp, bp = prepare_kernel_mapping(W, b, use_bf16=use_bf16)
    return kernel_mapping_sigmoid_apply(x, Wp, bp, cfg=cfg)


def init_params(key, input_dim, output_dim, gamma=1.0):
    """Matches the PyTorch __init__: W ~ N(0,1)*sqrt(2*gamma), b ~ U(0, 2*pi)."""
    kw, kb = jax.random.split(key)
    W = jax.random.normal(kw, (input_dim, output_dim), jnp.float32) * math.sqrt(2.0 * gamma)
    b = 2.0 * math.pi * jax.random.uniform(kb, (output_dim,), jnp.float32)
    return W, b


if __name__ == "__main__":
    key = jax.random.PRNGKey(0)
    kx, kp, kx2, kw2, kb2 = jax.random.split(key, 5)

    batch = 8
    input_dim = 32
    output_dim = 128
    gamma = 1.0

    x = jax.random.normal(kx, (batch, input_dim), jnp.float32)
    W, b = init_params(kp, input_dim, output_dim, gamma)
    ref = jax.nn.sigmoid(x @ W + b)

    # Prepare once (W/b cast + pad hoisted out of the per-call path), apply many times.
    cfg, Wp, bp = prepare_kernel_mapping(W, b, use_bf16=True)
    out = jax.block_until_ready(kernel_mapping_sigmoid_apply(x, Wp, bp, cfg=cfg))
    assert out.shape == (batch, output_dim)
    assert out.dtype == ref.dtype
    assert jnp.max(jnp.abs(out - ref)) < 5e-2          # bf16 matmul tolerance

    # f32 path, tighter tolerance (exact tanh-based sigmoid, f32 MXU).
    cfg32, Wp32, bp32 = prepare_kernel_mapping(W, b, use_bf16=False)
    out32 = jax.block_until_ready(kernel_mapping_sigmoid_apply(x, Wp32, bp32, cfg=cfg32))
    assert jnp.max(jnp.abs(out32 - ref)) < 2e-3

    # Odd shapes exercise the padding path via the one-shot wrapper.
    x2 = jax.random.normal(kx2, (5, input_dim), jnp.float32)
    W2 = jax.random.normal(kw2, (input_dim, 200), jnp.float32) * math.sqrt(2.0)
    b2 = 2.0 * math.pi * jax.random.uniform(kb2, (200,), jnp.float32)
    out2 = jax.block_until_ready(kernel_mapping_sigmoid(x2, W2, b2))
    ref2 = jax.nn.sigmoid(x2 @ W2 + b2)
    assert out2.shape == (5, 200)
    assert jnp.max(jnp.abs(out2 - ref2)) < 5e-2

    print("KERNEL_OK")
</pallas_src>

<mosaic_0001>
module attributes {stable_mosaic.version = 11 : i64} {
  func.func @_fused_kernel(%arg0: i32, %arg1: i32, %arg2: memref<16x32xbf16, #tpu.memory_space<vmem>>, %arg3: memref<32x128xbf16, #tpu.memory_space<vmem>>, %arg4: memref<1x128xf32, #tpu.memory_space<vmem>>, %arg5: memref<16x128xf32, #tpu.memory_space<vmem>>) attributes {dimension_semantics = [#tpu.dimension_semantics<parallel>, #tpu.dimension_semantics<parallel>], iteration_bounds = array<i64: 1, 1>, scalar_prefetch = 0 : i64, scratch_operands = 0 : i64, tpu.core_type = #tpu.core_type<tc>, window_params = [{transform_indices = @transform_0, window_bounds = array<i64: 16, 32>}, {transform_indices = @transform_1, window_bounds = array<i64: 32, 128>}, {transform_indices = @transform_2, window_bounds = array<i64: 1, 128>}, {transform_indices = @transform_3, window_bounds = array<i64: 16, 128>}]} {
    %c0 = arith.constant 0 : index
    %c0_0 = arith.constant 0 : index
    %0 = vector.load %arg2[%c0, %c0_0] : memref<16x32xbf16, #tpu.memory_space<vmem>>, vector<16x32xbf16>
    %c0_1 = arith.constant 0 : index
    %c0_2 = arith.constant 0 : index
    %1 = vector.load %arg3[%c0_1, %c0_2] : memref<32x128xbf16, #tpu.memory_space<vmem>>, vector<32x128xbf16>
    %cst = arith.constant dense<0.000000e+00> : vector<16x128xf32>
    %2 = tpu.matmul %0, %1, %cst {dimension_numbers = #tpu.dot_dimension_numbers<[1], [0], [0], [1], [0, 0, 1, 1], [], []>} : vector<16x32xbf16>, vector<32x128xbf16>, vector<16x128xf32> -> vector<16x128xf32>
    %c0_3 = arith.constant 0 : index
    %c0_4 = arith.constant 0 : index
    %3 = vector.load %arg4[%c0_3, %c0_4] : memref<1x128xf32, #tpu.memory_space<vmem>>, vector<1x128xf32>
    %4 = vector.broadcast %3 : vector<1x128xf32> to vector<16x128xf32>
    %5 = arith.addf %2, %4 : vector<16x128xf32>
    %cst_5 = arith.constant 5.000000e-01 : f32
    %6 = vector.broadcast %cst_5 : f32 to vector<16x128xf32>
    %7 = arith.mulf %6, %5 : vector<16x128xf32>
    %8 = math.tanh %7 : vector<16x128xf32>
    %cst_6 = arith.constant 1.000000e+00 : f32
    %9 = vector.broadcast %cst_6 : f32 to vector<16x128xf32>
    %10 = arith.addf %9, %8 : vector<16x128xf32>
    %cst_7 = arith.constant 5.000000e-01 : f32
    %11 = vector.broadcast %cst_7 : f32 to vector<16x128xf32>
    %12 = arith.mulf %11, %10 : vector<16x128xf32>
    %c0_8 = arith.constant 0 : index
    %c0_9 = arith.constant 0 : index
    %13 = vector.load %arg5[%c0_8, %c0_9] : memref<16x128xf32, #tpu.memory_space<vmem>>, vector<16x128xf32>
    tpu.vector_store %arg5[%c0_8, %c0_9], %12 {strides = array<i32>} : memref<16x128xf32, #tpu.memory_space<vmem>>, vector<16x128xf32>,
    return
  }
  func.func @transform_0(%arg0: i32, %arg1: i32) -> (i32, i32) {
    %c0_i32 = arith.constant 0 : i32
    %c0_i32_0 = arith.constant 0 : i32
    return %arg1, %c0_i32 : i32, i32
  }
  func.func @transform_1(%arg0: i32, %arg1: i32) -> (i32, i32) {
    %c0_i32 = arith.constant 0 : i32
    %c0_i32_0 = arith.constant 0 : i32
    return %c0_i32, %arg0 : i32, i32
  }
  func.func @transform_2(%arg0: i32, %arg1: i32) -> (i32, i32) {
    %c0_i32 = arith.constant 0 : i32
    %c0_i32_0 = arith.constant 0 : i32
    return %c0_i32, %arg0 : i32, i32
  }
  func.func @transform_3(%arg0: i32, %arg1: i32) -> (i32, i32) {
    %c0_i32 = arith.constant 0 : i32
    return %arg1, %arg0 : i32, i32
  }
}

</mosaic_0001>

<llo_original>
// kernel: kernel_mapping_sigmoid_apply.1
$region0: #{kernel_mapping_sigmoid_apply.1}
  #allocation0 [shape = 'u32[]', space=smem, size = 0x4, offset = 0x4, fixed_abs, tag = 'smem constant byte address 0x4 - core index']
  #allocation1 [shape = 'u32[72,128]{1,0:T(1,128)}', space=vmem, size = 0x9000, scoped, tag = 'internal scratch']
  %s0 = inlined_call_operand.vmem [shape: bf16[16,32], index: 0, kind: input, shape index: {}]
  %s1 = inlined_call_operand.vmem [shape: bf16[32,128], index: 1, kind: input, shape index: {}]
  %s2 = inlined_call_operand.vmem [shape: f32[1,128], index: 2, kind: input, shape index: {}]
  %s3 = inlined_call_operand.vmem [shape: f32[16,128], index: 3, kind: output, shape index: {}]
  %s4 = sld [smem:[#allocation0]]
  $region22: #{kernel_mapping_sigmoid_apply.1} parent=0
    _
  %s6 = ssub.s32 1, %s4
  %s7 = scalar_select 0, %s6, %s4
  // Predicated region
  $region2: #{kernel_mapping_sigmoid_apply.1} parent=0 // pred_check
    _
  $region3: #{kernel_mapping_sigmoid_apply.1} parent=0 // pred_check_branch
    %9 = sbr.rel (0) target = $region5
  $region4: #{kernel_mapping_sigmoid_apply.1} parent=0 // pred_region
    _
  $region5: #{kernel_mapping_sigmoid_apply.1} parent=0 // pred_fallthru
    _
  // Predicated region
  $region6: #{kernel_mapping_sigmoid_apply.1} parent=0 // pred_check
    _
  $region7: #{kernel_mapping_sigmoid_apply.1} parent=0 // pred_check_branch
    %11 = sbr.rel (0) target = $region9
  $region8: #{kernel_mapping_sigmoid_apply.1} parent=0 // pred_region
    _
  $region9: #{kernel_mapping_sigmoid_apply.1} parent=0 // pred_fallthru
    _
  // Predicated region
  $region10: #{kernel_mapping_sigmoid_apply.1} parent=0 // pred_check
    _
  $region11: #{kernel_mapping_sigmoid_apply.1} parent=0 // pred_check_branch
    %13 = sbr.rel (0) target = $region13
  $region12: #{kernel_mapping_sigmoid_apply.1} parent=0 // pred_region
    _
  $region13: #{kernel_mapping_sigmoid_apply.1} parent=0 // pred_fallthru
    _
  %v15 = vld [vmem:[%s0] sm:$0xf]
  %v16 = vld [vmem:[%s0 + $0x4] sm:$0xf]
  %v17 = vld [vmem:[%s1] sm:$0xf]
  %v18 = vld [vmem:[%s1 + $0x4] sm:$0xf]
  %v19 = vld [vmem:[%s1 + $0x8] sm:$0xf]
  %v20 = vld [vmem:[%s1 + $0xc] sm:$0xf]
  %v21 = vld [vmem:[%s2] sm:$0x1]
  %v23 = vperm.slane %v21, 0
  %v27 = vunpack.c.l.b16 %v15
  %v28 = vunpack.c.l.b16 %v16
  %v29 = vpack.c.b16 %v28, %v27
  %v34 = vunpack.c.l.b16 %v17
  %v35 = vunpack.c.l.b16 %v18
  %v36 = vunpack.c.l.b16 %v19
  %v37 = vunpack.c.l.b16 %v20
  %v38 = vpack.c.b16 %v35, %v34
  %v39 = vpack.c.b16 %v37, %v36
  %vm42 = vcmask 261120
  %v44 = vsel %vm42, %v29, 0
  %46 = vmatpush.bf16.msra.mxu0 0
  %47 = vmatpush.bf16.msra.mxu0 0
  %48 = vmatpush.bf16.msra.mxu0 0
  %49 = vmatpush.bf16.msra.mxu0 0
  %50 = vmatpush.bf16.msra.mxu0 0
  %51 = vmatpush.bf16.msra.mxu0 0
  %52 = vmatpush.bf16.msra.mxu0 %v39
  %53 = vmatpush.bf16.msra.mxu0 %v38
  %54 = vmatmul.bf16.gmra.mxu0 %v44
  %v55 = vpop.f32.mrf.mxu0
  %v56 = vadd.f32 %v23, %v55
  %v57 = vpop.f32.mrf.mxu0
  %v58 = vadd.f32 %v23, %v57
  %59 = vdwg.mxu0
  %v60 = vmul.f32 %v56, 0.5
  %v61 = vmul.f32 %v58, 0.5
  %v62 = vtanh.pop %v60
  %v63 = vtanh.pop %v61
  %v64 = vadd.f32 %v62, 1.0
  %v65 = vadd.f32 %v63, 1.0
  %v66 = vmul.f32 %v64, 0.5
  %v67 = vmul.f32 %v65, 0.5
  %68 = vst [vmem:[%s3] sm:$0xff] %v66
  %69 = vst [vmem:[%s3 + $0x8] sm:$0xff] %v67
  // Predicated region
  $region14: #{kernel_mapping_sigmoid_apply.1} parent=0 // pred_check
    _
  $region15: #{kernel_mapping_sigmoid_apply.1} parent=0 // pred_check_branch
    %71 = sbr.rel (0) target = $region17
  $region16: #{kernel_mapping_sigmoid_apply.1} parent=0 // pred_region
    _
  $region17: #{kernel_mapping_sigmoid_apply.1} parent=0 // pred_fallthru
    _
  // Predicated region
  $region18: #{kernel_mapping_sigmoid_apply.1} parent=0 // pred_check
    _
  $region19: #{kernel_mapping_sigmoid_apply.1} parent=0 // pred_check_branch
    %73 = sbr.rel (0) target = $region21
  $region20: #{kernel_mapping_sigmoid_apply.1} parent=0 // pred_region
    _
  $region21: #{kernel_mapping_sigmoid_apply.1} parent=0 // pred_fallthru
    _

</llo_original>
